<compile_context>
chip_gen: v6e
topology: v6e:2x2x1
jax: 0.10.0
libtpu: 0.0.40
codegen_flags: <defaults>
</compile_context>

<pallas_src>
import jax
import jax.numpy as jnp
from jax.experimental import pallas as pl
from jax.experimental.pallas import tpu as pltpu

# Small synthetic model dims (consistent with the module's forward).
VOCAB = 128
B, S, H = 2, 8, 32
N_HEADS = 2
HEAD_DIM = H // N_HEADS
FFN = 64
OUT_DIM = 3            # output_dim of SentimentNN's fc
OUT_PAD = 128          # lane-dense padded logits width
OUT_ROWS = 8           # full sublane tile for the output store
LN_EPS = 1e-12
MASK_NEG = -1e9

assert B <= OUT_ROWS

# ---- packed weight slab column offsets (each block starts on a 128-lane boundary) ----
QKV_OFF, QKV_W = 0, 3 * H        # fused Wq|Wk|Wv   (H, 96)  (scale folded into Wq)
WO_OFF, WO_W = 128, H            # attention output (H, 32)
W1_OFF, W1_W = 256, FFN          # FFN up           (H, 64)
WP_OFF, WP_W = 384, H            # pooler           (H, 32)
WFC_OFF, WFC_W = 512, OUT_PAD    # final fc, padded (H, 128)
WSLAB_COLS = 640

# ---- bias / LayerNorm slab rows (each row zero-padded to 128 lanes) ----
R_LN0G, R_LN0B = 0, 1
R_BQKV = 2
R_BO = 3
R_LN1G, R_LN1B = 4, 5
R_B1 = 6
R_B2 = 7
R_LN2G, R_LN2B = 8, 9
R_BP = 10
R_BFC = 11
N_BIAS_ROWS = 12


def _layer_norm(x, gamma, beta):
    mu = jnp.mean(x, axis=-1, keepdims=True)
    var = jnp.mean((x - mu) ** 2, axis=-1, keepdims=True)
    return (x - mu) * jax.lax.rsqrt(var + LN_EPS) * gamma + beta


def _gelu(x):
    # BERT gelu (tanh approximation) -> EUP tanh
    c = 0.7978845608028654  # sqrt(2/pi)
    return 0.5 * x * (1.0 + jnp.tanh(c * (x + 0.044715 * x * x * x)))


def _mm(x, w_bf16):
    # bf16 MXU matmul, f32 accumulation (elementwise math stays f32).
    return jnp.dot(x.astype(jnp.bfloat16), w_bf16,
                   preferred_element_type=jnp.float32)


def sentiment_kernel(x_ref, mask_ref, w32_ref, w64_ref, bias_ref, out_ref):
    # x_ref:    (B*S, H)      f32  token embeddings (flattened batch*seq)
    # mask_ref: (B, S)        f32  additive attention mask (0 or -1e9)
    # w32_ref:  (H, 640)      bf16 packed weight slab
    # w64_ref:  (FFN, H)      bf16 FFN down-projection
    # bias_ref: (12, 128)     f32  packed biases / LayerNorm params
    # out_ref:  (8, 128)      f32  lane-dense, full-tile padded logits
    x = x_ref[...]
    add_mask = mask_ref[...]
    bias = bias_ref[...]

    # Static ref-view slices into the weight slab (zero-cost views).
    wqkv = w32_ref[:, QKV_OFF:QKV_OFF + QKV_W]
    wo = w32_ref[:, WO_OFF:WO_OFF + WO_W]
    w1 = w32_ref[:, W1_OFF:W1_OFF + W1_W]
    wp = w32_ref[:, WP_OFF:WP_OFF + WP_W]
    wfc = w32_ref[:, WFC_OFF:WFC_OFF + WFC_W]
    w2 = w64_ref[...]

    ln0g, ln0b = bias[R_LN0G:R_LN0G + 1, :H], bias[R_LN0B:R_LN0B + 1, :H]
    bqkv = bias[R_BQKV:R_BQKV + 1, :3 * H]
    bo = bias[R_BO:R_BO + 1, :H]
    ln1g, ln1b = bias[R_LN1G:R_LN1G + 1, :H], bias[R_LN1B:R_LN1B + 1, :H]
    b1 = bias[R_B1:R_B1 + 1, :FFN]
    b2 = bias[R_B2:R_B2 + 1, :H]
    ln2g, ln2b = bias[R_LN2G:R_LN2G + 1, :H], bias[R_LN2B:R_LN2B + 1, :H]
    bp = bias[R_BP:R_BP + 1, :H]
    bfc = bias[R_BFC:R_BFC + 1, :OUT_PAD]

    # Embedding layer norm over all B*S rows at once.
    h0 = _layer_norm(x, ln0g, ln0b)

    # Fused QKV projection: single (B*S, H) @ (H, 3H) matmul.
    # One f32->bf16 cast of the whole QKV activation (was 6 per-head casts).
    qkv = (_mm(h0, wqkv) + bqkv).astype(jnp.bfloat16)      # (B*S, 3H)
    qkv3 = qkv.reshape(B, S, 3 * H)

    # Mask broadcast hoisted once (not per-head; broadcast_in_dim is not CSE'd).
    mask3 = jnp.broadcast_to(add_mask[:, None, :], (B, S, S))

    # Attention. 1/sqrt(HEAD_DIM) is pre-folded into Wq/bq at pack time.
    # Heads are unrolled at trace time (N_HEADS=2); no trailing lane concat:
    # each head's context goes through its own sublane row-block of Wo and the
    # partial projections are summed.
    attn = jnp.zeros((B * S, H), jnp.float32)
    for hidx in range(N_HEADS):
        lo = hidx * HEAD_DIM
        hi = lo + HEAD_DIM
        qh = qkv3[:, :, lo:hi]
        kh = qkv3[:, :, H + lo:H + hi]
        vh = qkv3[:, :, 2 * H + lo:2 * H + hi]
        scores = jnp.einsum('bqd,bkd->bqk', qh, kh,
                            preferred_element_type=jnp.float32)
        scores = scores + mask3
        scores = scores - jnp.max(scores, axis=-1, keepdims=True)
        p = jnp.exp(scores)
        p = p * pl.reciprocal(jnp.sum(p, axis=-1, keepdims=True), approx=True)
        ctx = jnp.einsum('bqk,bkd->bqd', p.astype(jnp.bfloat16), vh,
                         preferred_element_type=jnp.float32)     # (B, S, HD) f32
        attn = attn + _mm(ctx.reshape(B * S, HEAD_DIM), wo[lo:hi, :])
    attn = attn + bo

    h1 = _layer_norm(h0 + attn, ln1g, ln1b)

    # Feed-forward block (whole B*S at once).
    ff = _gelu(_mm(h1, w1) + b1)
    ff = _mm(ff, w2) + b2
    h2 = _layer_norm(h1 + ff, ln2g, ln2b)

    # BERT pooler on the [CLS] token: flat-row offsets 0, S, 2S, ... gathered
    # with sublane-aligned static row slices (S is a multiple of 8) instead of
    # a reshape-based select.
    cls = jnp.concatenate([h2[b * S:b * S + 1, :] for b in range(B)], axis=0)
    pooled = jnp.tanh(_mm(cls, wp) + bp)

    # SentimentNN.fc — lane-dense padded logits.  Pad to a full (8, 128) tile
    # so the single output store is unmasked; wrapper slices [:B, :OUT_DIM].
    logits = _mm(pooled, wfc) + bfc                                   # (B, 128)
    pad = jnp.zeros((OUT_ROWS - B, OUT_PAD), jnp.float32)
    out_ref[...] = jnp.concatenate([logits, pad], axis=0)


def init_params(key):
    # Deterministic synthetic weights (BERT is frozen / no_grad in the module;
    # we init it in-script instead of loading a checkpoint).
    keys = jax.random.split(key, 10)

    def w(k, shape):
        return jax.random.normal(k, shape, jnp.float32) * 0.02

    return dict(
        word_emb=w(keys[0], (VOCAB, H)),
        pos_emb=w(keys[1], (S, H)),
        ln0_g=jnp.ones((H,), jnp.float32), ln0_b=jnp.zeros((H,), jnp.float32),
        wq=w(keys[2], (H, H)), bq=jnp.zeros((H,), jnp.float32),
        wk=w(keys[3], (H, H)), bk=jnp.zeros((H,), jnp.float32),
        wv=w(keys[4], (H, H)), bv=jnp.zeros((H,), jnp.float32),
        wo=w(keys[5], (H, H)), bo=jnp.zeros((H,), jnp.float32),
        ln1_g=jnp.ones((H,), jnp.float32), ln1_b=jnp.zeros((H,), jnp.float32),
        w1=w(keys[6], (H, FFN)), b1=jnp.zeros((FFN,), jnp.float32),
        w2=w(keys[7], (FFN, H)), b2=jnp.zeros((H,), jnp.float32),
        ln2_g=jnp.ones((H,), jnp.float32), ln2_b=jnp.zeros((H,), jnp.float32),
        wp=w(keys[8], (H, H)), bp=jnp.zeros((H,), jnp.float32),
        wfc=w(keys[9], (H, OUT_DIM)), bfc=jnp.zeros((OUT_DIM,), jnp.float32),
    )


def pack_params(p):
    # Weight slab: every weight block starts on a 128-lane boundary; bf16 for MXU.
    # The attention softmax scale 1/sqrt(HEAD_DIM) is folded into Wq / bq here
    # (saves an in-kernel multiply; numerically equivalent).
    scale = 1.0 / (HEAD_DIM ** 0.5)
    wq = p['wq'] * scale
    bq = p['bq'] * scale

    w32 = jnp.zeros((H, WSLAB_COLS), jnp.float32)
    w32 = w32.at[:, QKV_OFF:QKV_OFF + 3 * H].set(
        jnp.concatenate([wq, p['wk'], p['wv']], axis=1))
    w32 = w32.at[:, WO_OFF:WO_OFF + H].set(p['wo'])
    w32 = w32.at[:, W1_OFF:W1_OFF + FFN].set(p['w1'])
    w32 = w32.at[:, WP_OFF:WP_OFF + H].set(p['wp'])
    w32 = w32.at[:, WFC_OFF:WFC_OFF + OUT_DIM].set(p['wfc'])

    def row(v):
        return jnp.zeros((OUT_PAD,), jnp.float32).at[:v.shape[0]].set(v)

    bias = jnp.stack([
        row(p['ln0_g']), row(p['ln0_b']),
        row(jnp.concatenate([bq, p['bk'], p['bv']])),
        row(p['bo']),
        row(p['ln1_g']), row(p['ln1_b']),
        row(p['b1']), row(p['b2']),
        row(p['ln2_g']), row(p['ln2_b']),
        row(p['bp']), row(p['bfc']),
    ])
    assert bias.shape == (N_BIAS_ROWS, OUT_PAD)

    return dict(word_emb=p['word_emb'], pos_emb=p['pos_emb'],
                w32=w32.astype(jnp.bfloat16),
                w64=p['w2'].astype(jnp.bfloat16),
                bias=bias)


@jax.jit
def sentiment_forward(input_ids, attention_mask, packed):
    # Glue in plain JAX: embedding lookup, flattening, additive mask (kept
    # (B, S) — broadcast to (B, S, S) happens inside the kernel, cutting the
    # mask operand DMA from B*S^2 to B*S floats).
    emb = packed['word_emb'][input_ids] + packed['pos_emb'][None, :, :]  # (B,S,H)
    x_flat = emb.reshape(B * S, H)
    add_mask = (1.0 - attention_mask.astype(jnp.float32)) * MASK_NEG     # (B,S)

    vmem = pltpu.MemorySpace.VMEM
    logits_pad = pl.pallas_call(
        sentiment_kernel,
        out_shape=jax.ShapeDtypeStruct((OUT_ROWS, OUT_PAD), jnp.float32),
        in_specs=[pl.BlockSpec(memory_space=vmem)] * 5,
        out_specs=pl.BlockSpec(memory_space=vmem),
    )(x_flat, add_mask, packed['w32'], packed['w64'], packed['bias'])

    return logits_pad[:B, :OUT_DIM]


if __name__ == "__main__":
    key = jax.random.PRNGKey(0)
    pkey, ikey = jax.random.split(key)
    packed = pack_params(init_params(pkey))

    input_ids = jax.random.randint(ikey, (B, S), 0, VOCAB, dtype=jnp.int32)
    # Pad out the last two tokens of sample 1 (exercise the attention mask).
    attention_mask = jnp.ones((B, S), jnp.float32).at[1, 6:].set(0.0)

    logits = sentiment_forward(input_ids, attention_mask, packed)
    jax.block_until_ready(logits)
    assert logits.shape == (B, OUT_DIM)
    assert bool(jnp.all(jnp.isfinite(logits)))
    print("KERNEL_OK")
</pallas_src>

<mosaic_0001>
module attributes {stable_mosaic.version = 11 : i64} {
  func.func @sentiment_kernel(%arg0: memref<16x32xf32, #tpu.memory_space<vmem>>, %arg1: memref<2x8xf32, #tpu.memory_space<vmem>>, %arg2: memref<32x640xbf16, #tpu.memory_space<vmem>>, %arg3: memref<64x32xbf16, #tpu.memory_space<vmem>>, %arg4: memref<12x128xf32, #tpu.memory_space<vmem>>, %arg5: memref<8x128xf32, #tpu.memory_space<vmem>>) attributes {dimension_semantics = [], scalar_prefetch = 0 : i64, scratch_operands = 0 : i64, tpu.core_type = #tpu.core_type<tc>} {
    %c0 = arith.constant 0 : index
    %c0_0 = arith.constant 0 : index
    %0 = vector.load %arg0[%c0, %c0_0] : memref<16x32xf32, #tpu.memory_space<vmem>>, vector<16x32xf32>
    %c0_1 = arith.constant 0 : index
    %c0_2 = arith.constant 0 : index
    %1 = vector.load %arg1[%c0_1, %c0_2] : memref<2x8xf32, #tpu.memory_space<vmem>>, vector<2x8xf32>
    %c0_3 = arith.constant 0 : index
    %c0_4 = arith.constant 0 : index
    %2 = vector.load %arg4[%c0_3, %c0_4] : memref<12x128xf32, #tpu.memory_space<vmem>>, vector<12x128xf32>
    %c0_5 = arith.constant 0 : index
    %c0_6 = arith.constant 0 : index
    %3 = vector.load %arg2[%c0_5, %c0_6] : memref<32x640xbf16, #tpu.memory_space<vmem>>, vector<32x96xbf16>
    %c0_7 = arith.constant 0 : index
    %c128 = arith.constant 128 : index
    %4 = vector.load %arg2[%c0_7, %c128] : memref<32x640xbf16, #tpu.memory_space<vmem>>, vector<32x32xbf16>
    %c0_8 = arith.constant 0 : index
    %c256 = arith.constant 256 : index
    %5 = vector.load %arg2[%c0_8, %c256] : memref<32x640xbf16, #tpu.memory_space<vmem>>, vector<32x64xbf16>
    %c0_9 = arith.constant 0 : index
    %c384 = arith.constant 384 : index
    %6 = vector.load %arg2[%c0_9, %c384] : memref<32x640xbf16, #tpu.memory_space<vmem>>, vector<32x32xbf16>
    %c0_10 = arith.constant 0 : index
    %c512 = arith.constant 512 : index
    %7 = vector.load %arg2[%c0_10, %c512] : memref<32x640xbf16, #tpu.memory_space<vmem>>, vector<32x128xbf16>
    %c0_11 = arith.constant 0 : index
    %c0_12 = arith.constant 0 : index
    %8 = vector.load %arg3[%c0_11, %c0_12] : memref<64x32xbf16, #tpu.memory_space<vmem>>, vector<64x32xbf16>
    %9 = vector.extract_strided_slice %2 {offsets = [0, 0], sizes = [1, 32], strides = [1, 1]} : vector<12x128xf32> to vector<1x32xf32>
    %10 = vector.extract_strided_slice %2 {offsets = [1, 0], sizes = [1, 32], strides = [1, 1]} : vector<12x128xf32> to vector<1x32xf32>
    %11 = vector.extract_strided_slice %2 {offsets = [2, 0], sizes = [1, 96], strides = [1, 1]} : vector<12x128xf32> to vector<1x96xf32>
    %12 = vector.extract_strided_slice %2 {offsets = [3, 0], sizes = [1, 32], strides = [1, 1]} : vector<12x128xf32> to vector<1x32xf32>
    %13 = vector.extract_strided_slice %2 {offsets = [4, 0], sizes = [1, 32], strides = [1, 1]} : vector<12x128xf32> to vector<1x32xf32>
    %14 = vector.extract_strided_slice %2 {offsets = [5, 0], sizes = [1, 32], strides = [1, 1]} : vector<12x128xf32> to vector<1x32xf32>
    %15 = vector.extract_strided_slice %2 {offsets = [6, 0], sizes = [1, 64], strides = [1, 1]} : vector<12x128xf32> to vector<1x64xf32>
    %16 = vector.extract_strided_slice %2 {offsets = [7, 0], sizes = [1, 32], strides = [1, 1]} : vector<12x128xf32> to vector<1x32xf32>
    %17 = vector.extract_strided_slice %2 {offsets = [8, 0], sizes = [1, 32], strides = [1, 1]} : vector<12x128xf32> to vector<1x32xf32>
    %18 = vector.extract_strided_slice %2 {offsets = [9, 0], sizes = [1, 32], strides = [1, 1]} : vector<12x128xf32> to vector<1x32xf32>
    %19 = vector.extract_strided_slice %2 {offsets = [10, 0], sizes = [1, 32], strides = [1, 1]} : vector<12x128xf32> to vector<1x32xf32>
    %20 = vector.extract_strided_slice %2 {offsets = [11, 0], sizes = [1, 128], strides = [1, 1]} : vector<12x128xf32> to vector<1x128xf32>
    %cst = arith.constant dense<0.000000e+00> : vector<16xf32>
    %21 = vector.multi_reduction <add>, %0, %cst [1] : vector<16x32xf32> to vector<16xf32>
    %22 = vector.shape_cast %21 : vector<16xf32> to vector<16x1xf32>
    %cst_13 = arith.constant 3.200000e+01 : f32
    %23 = vector.broadcast %cst_13 : f32 to vector<16x1xf32>
    %24 = arith.divf %22, %23 : vector<16x1xf32>
    %25 = vector.broadcast %24 : vector<16x1xf32> to vector<16x32xf32>
    %26 = arith.subf %0, %25 : vector<16x32xf32>
    %27 = arith.mulf %26, %26 : vector<16x32xf32>
    %cst_14 = arith.constant dense<0.000000e+00> : vector<16xf32>
    %28 = vector.multi_reduction <add>, %27, %cst_14 [1] : vector<16x32xf32> to vector<16xf32>
    %29 = vector.shape_cast %28 : vector<16xf32> to vector<16x1xf32>
    %cst_15 = arith.constant 3.200000e+01 : f32
    %30 = vector.broadcast %cst_15 : f32 to vector<16x1xf32>
    %31 = arith.divf %29, %30 : vector<16x1xf32>
    %32 = vector.broadcast %24 : vector<16x1xf32> to vector<16x32xf32>
    %33 = arith.subf %0, %32 : vector<16x32xf32>
    %cst_16 = arith.constant 9.99999996E-13 : f32
    %34 = vector.broadcast %cst_16 : f32 to vector<16x1xf32>
    %35 = arith.addf %31, %34 : vector<16x1xf32>
    %36 = math.rsqrt %35 : vector<16x1xf32>
    %37 = vector.broadcast %36 : vector<16x1xf32> to vector<16x32xf32>
    %38 = arith.mulf %33, %37 : vector<16x32xf32>
    %39 = vector.broadcast %9 : vector<1x32xf32> to vector<16x32xf32>
    %40 = arith.mulf %38, %39 : vector<16x32xf32>
    %41 = vector.broadcast %10 : vector<1x32xf32> to vector<16x32xf32>
    %42 = arith.addf %40, %41 : vector<16x32xf32>
    %43 = arith.truncf %42 : vector<16x32xf32> to vector<16x32xbf16>
    %cst_17 = arith.constant dense<0.000000e+00> : vector<16x96xf32>
    %44 = tpu.matmul %43, %3, %cst_17 {dimension_numbers = #tpu.dot_dimension_numbers<[1], [0], [0], [1], [0, 0, 1, 1], [], []>} : vector<16x32xbf16>, vector<32x96xbf16>, vector<16x96xf32> -> vector<16x96xf32>
    %45 = vector.broadcast %11 : vector<1x96xf32> to vector<16x96xf32>
    %46 = arith.addf %44, %45 : vector<16x96xf32>
    %47 = arith.truncf %46 : vector<16x96xf32> to vector<16x96xbf16>
    %48 = vector.shape_cast %47 : vector<16x96xbf16> to vector<2x8x96xbf16>
    %49 = vector.shape_cast %1 : vector<2x8xf32> to vector<2x1x8xf32>
    %50 = vector.shape_cast %49 : vector<2x1x8xf32> to vector<2x1x8xf32>
    %51 = vector.broadcast %50 : vector<2x1x8xf32> to vector<2x8x8xf32>
    %cst_18 = arith.constant 0.000000e+00 : f32
    %52 = vector.broadcast %cst_18 : f32 to vector<16x32xf32>
    %53 = vector.extract_strided_slice %48 {offsets = [0, 0, 0], sizes = [2, 8, 16], strides = [1, 1, 1]} : vector<2x8x96xbf16> to vector<2x8x16xbf16>
    %54 = vector.extract_strided_slice %48 {offsets = [0, 0, 32], sizes = [2, 8, 16], strides = [1, 1, 1]} : vector<2x8x96xbf16> to vector<2x8x16xbf16>
    %55 = vector.extract_strided_slice %48 {offsets = [0, 0, 64], sizes = [2, 8, 16], strides = [1, 1, 1]} : vector<2x8x96xbf16> to vector<2x8x16xbf16>
    "tpu.trace_start"() <{level = 10 : i32, message = "bqd,bkd->bqk"}> : () -> ()
    %cst_19 = arith.constant dense<0.000000e+00> : vector<2x8x8xf32>
    %56 = tpu.matmul %53, %54, %cst_19 {dimension_numbers = #tpu.dot_dimension_numbers<[2], [2], [1], [1], [0, 0, 0, 1, 1, 1], [0], [0]>} : vector<2x8x16xbf16>, vector<2x8x16xbf16>, vector<2x8x8xf32> -> vector<2x8x8xf32>
    "tpu.trace_stop"() : () -> ()
    %57 = arith.addf %56, %51 : vector<2x8x8xf32>
    %cst_20 = arith.constant dense<0xFF800000> : vector<2x8xf32>
    %58 = vector.multi_reduction <maximumf>, %57, %cst_20 [2] : vector<2x8x8xf32> to vector<2x8xf32>
    %59 = vector.shape_cast %58 : vector<2x8xf32> to vector<2x8x1xf32>
    %60 = vector.broadcast %59 : vector<2x8x1xf32> to vector<2x8x8xf32>
    %61 = arith.subf %57, %60 : vector<2x8x8xf32>
    %62 = math.exp %61 : vector<2x8x8xf32>
    %cst_21 = arith.constant dense<0.000000e+00> : vector<2x8xf32>
    %63 = vector.multi_reduction <add>, %62, %cst_21 [2] : vector<2x8x8xf32> to vector<2x8xf32>
    %64 = vector.shape_cast %63 : vector<2x8xf32> to vector<2x8x1xf32>
    %65 = tpu.reciprocal %64 {approx = true} : vector<2x8x1xf32> -> vector<2x8x1xf32>
    %66 = vector.broadcast %65 : vector<2x8x1xf32> to vector<2x8x8xf32>
    %67 = arith.mulf %62, %66 : vector<2x8x8xf32>
    %68 = arith.truncf %67 : vector<2x8x8xf32> to vector<2x8x8xbf16>
    "tpu.trace_start"() <{level = 10 : i32, message = "bqk,bkd->bqd"}> : () -> ()
    %cst_22 = arith.constant dense<0.000000e+00> : vector<2x8x16xf32>
    %69 = tpu.matmul %68, %55, %cst_22 {dimension_numbers = #tpu.dot_dimension_numbers<[2], [1], [1], [2], [0, 0, 0, 1, 1, 2], [0], [0]>} : vector<2x8x8xbf16>, vector<2x8x16xbf16>, vector<2x8x16xf32> -> vector<2x8x16xf32>
    "tpu.trace_stop"() : () -> ()
    %70 = vector.shape_cast %69 : vector<2x8x16xf32> to vector<16x16xf32>
    %71 = vector.extract_strided_slice %4 {offsets = [0, 0], sizes = [16, 32], strides = [1, 1]} : vector<32x32xbf16> to vector<16x32xbf16>
    %72 = arith.truncf %70 : vector<16x16xf32> to vector<16x16xbf16>
    %cst_23 = arith.constant dense<0.000000e+00> : vector<16x32xf32>
    %73 = tpu.matmul %72, %71, %cst_23 {dimension_numbers = #tpu.dot_dimension_numbers<[1], [0], [0], [1], [0, 0, 1, 1], [], []>} : vector<16x16xbf16>, vector<16x32xbf16>, vector<16x32xf32> -> vector<16x32xf32>
    %74 = arith.addf %52, %73 : vector<16x32xf32>
    %75 = vector.extract_strided_slice %48 {offsets = [0, 0, 16], sizes = [2, 8, 16], strides = [1, 1, 1]} : vector<2x8x96xbf16> to vector<2x8x16xbf16>
    %76 = vector.extract_strided_slice %48 {offsets = [0, 0, 48], sizes = [2, 8, 16], strides = [1, 1, 1]} : vector<2x8x96xbf16> to vector<2x8x16xbf16>
    %77 = vector.extract_strided_slice %48 {offsets = [0, 0, 80], sizes = [2, 8, 16], strides = [1, 1, 1]} : vector<2x8x96xbf16> to vector<2x8x16xbf16>
    "tpu.trace_start"() <{level = 10 : i32, message = "bqd,bkd->bqk"}> : () -> ()
    %cst_24 = arith.constant dense<0.000000e+00> : vector<2x8x8xf32>
    %78 = tpu.matmul %75, %76, %cst_24 {dimension_numbers = #tpu.dot_dimension_numbers<[2], [2], [1], [1], [0, 0, 0, 1, 1, 1], [0], [0]>} : vector<2x8x16xbf16>, vector<2x8x16xbf16>, vector<2x8x8xf32> -> vector<2x8x8xf32>
    "tpu.trace_stop"() : () -> ()
    %79 = arith.addf %78, %51 : vector<2x8x8xf32>
    %cst_25 = arith.constant dense<0xFF800000> : vector<2x8xf32>
    %80 = vector.multi_reduction <maximumf>, %79, %cst_25 [2] : vector<2x8x8xf32> to vector<2x8xf32>
    %81 = vector.shape_cast %80 : vector<2x8xf32> to vector<2x8x1xf32>
    %82 = vector.broadcast %81 : vector<2x8x1xf32> to vector<2x8x8xf32>
    %83 = arith.subf %79, %82 : vector<2x8x8xf32>
    %84 = math.exp %83 : vector<2x8x8xf32>
    %cst_26 = arith.constant dense<0.000000e+00> : vector<2x8xf32>
    %85 = vector.multi_reduction <add>, %84, %cst_26 [2] : vector<2x8x8xf32> to vector<2x8xf32>
    %86 = vector.shape_cast %85 : vector<2x8xf32> to vector<2x8x1xf32>
    %87 = tpu.reciprocal %86 {approx = true} : vector<2x8x1xf32> -> vector<2x8x1xf32>
    %88 = vector.broadcast %87 : vector<2x8x1xf32> to vector<2x8x8xf32>
    %89 = arith.mulf %84, %88 : vector<2x8x8xf32>
    %90 = arith.truncf %89 : vector<2x8x8xf32> to vector<2x8x8xbf16>
    "tpu.trace_start"() <{level = 10 : i32, message = "bqk,bkd->bqd"}> : () -> ()
    %cst_27 = arith.constant dense<0.000000e+00> : vector<2x8x16xf32>
    %91 = tpu.matmul %90, %77, %cst_27 {dimension_numbers = #tpu.dot_dimension_numbers<[2], [1], [1], [2], [0, 0, 0, 1, 1, 2], [0], [0]>} : vector<2x8x8xbf16>, vector<2x8x16xbf16>, vector<2x8x16xf32> -> vector<2x8x16xf32>
    "tpu.trace_stop"() : () -> ()
    %92 = vector.shape_cast %91 : vector<2x8x16xf32> to vector<16x16xf32>
    %93 = vector.extract_strided_slice %4 {offsets = [16, 0], sizes = [16, 32], strides = [1, 1]} : vector<32x32xbf16> to vector<16x32xbf16>
    %94 = arith.truncf %92 : vector<16x16xf32> to vector<16x16xbf16>
    %cst_28 = arith.constant dense<0.000000e+00> : vector<16x32xf32>
    %95 = tpu.matmul %94, %93, %cst_28 {dimension_numbers = #tpu.dot_dimension_numbers<[1], [0], [0], [1], [0, 0, 1, 1], [], []>} : vector<16x16xbf16>, vector<16x32xbf16>, vector<16x32xf32> -> vector<16x32xf32>
    %96 = arith.addf %74, %95 : vector<16x32xf32>
    %97 = vector.broadcast %12 : vector<1x32xf32> to vector<16x32xf32>
    %98 = arith.addf %96, %97 : vector<16x32xf32>
    %99 = arith.addf %42, %98 : vector<16x32xf32>
    %cst_29 = arith.constant dense<0.000000e+00> : vector<16xf32>
    %100 = vector.multi_reduction <add>, %99, %cst_29 [1] : vector<16x32xf32> to vector<16xf32>
    %101 = vector.shape_cast %100 : vector<16xf32> to vector<16x1xf32>
    %cst_30 = arith.constant 3.200000e+01 : f32
    %102 = vector.broadcast %cst_30 : f32 to vector<16x1xf32>
    %103 = arith.divf %101, %102 : vector<16x1xf32>
    %104 = vector.broadcast %103 : vector<16x1xf32> to vector<16x32xf32>
    %105 = arith.subf %99, %104 : vector<16x32xf32>
    %106 = arith.mulf %105, %105 : vector<16x32xf32>
    %cst_31 = arith.constant dense<0.000000e+00> : vector<16xf32>
    %107 = vector.multi_reduction <add>, %106, %cst_31 [1] : vector<16x32xf32> to vector<16xf32>
    %108 = vector.shape_cast %107 : vector<16xf32> to vector<16x1xf32>
    %cst_32 = arith.constant 3.200000e+01 : f32
    %109 = vector.broadcast %cst_32 : f32 to vector<16x1xf32>
    %110 = arith.divf %108, %109 : vector<16x1xf32>
    %111 = vector.broadcast %103 : vector<16x1xf32> to vector<16x32xf32>
    %112 = arith.subf %99, %111 : vector<16x32xf32>
    %cst_33 = arith.constant 9.99999996E-13 : f32
    %113 = vector.broadcast %cst_33 : f32 to vector<16x1xf32>
    %114 = arith.addf %110, %113 : vector<16x1xf32>
    %115 = math.rsqrt %114 : vector<16x1xf32>
    %116 = vector.broadcast %115 : vector<16x1xf32> to vector<16x32xf32>
    %117 = arith.mulf %112, %116 : vector<16x32xf32>
    %118 = vector.broadcast %13 : vector<1x32xf32> to vector<16x32xf32>
    %119 = arith.mulf %117, %118 : vector<16x32xf32>
    %120 = vector.broadcast %14 : vector<1x32xf32> to vector<16x32xf32>
    %121 = arith.addf %119, %120 : vector<16x32xf32>
    %122 = arith.truncf %121 : vector<16x32xf32> to vector<16x32xbf16>
    %cst_34 = arith.constant dense<0.000000e+00> : vector<16x64xf32>
    %123 = tpu.matmul %122, %5, %cst_34 {dimension_numbers = #tpu.dot_dimension_numbers<[1], [0], [0], [1], [0, 0, 1, 1], [], []>} : vector<16x32xbf16>, vector<32x64xbf16>, vector<16x64xf32> -> vector<16x64xf32>
    %124 = vector.broadcast %15 : vector<1x64xf32> to vector<16x64xf32>
    %125 = arith.addf %123, %124 : vector<16x64xf32>
    %cst_35 = arith.constant 5.000000e-01 : f32
    %126 = vector.broadcast %cst_35 : f32 to vector<16x64xf32>
    %127 = arith.mulf %126, %125 : vector<16x64xf32>
    %cst_36 = arith.constant 4.471500e-02 : f32
    %128 = vector.broadcast %cst_36 : f32 to vector<16x64xf32>
    %129 = arith.mulf %128, %125 : vector<16x64xf32>
    %130 = arith.mulf %129, %125 : vector<16x64xf32>
    %131 = arith.mulf %130, %125 : vector<16x64xf32>
    %132 = arith.addf %125, %131 : vector<16x64xf32>
    %cst_37 = arith.constant 0.797884583 : f32
    %133 = vector.broadcast %cst_37 : f32 to vector<16x64xf32>
    %134 = arith.mulf %133, %132 : vector<16x64xf32>
    %135 = math.tanh %134 : vector<16x64xf32>
    %cst_38 = arith.constant 1.000000e+00 : f32
    %136 = vector.broadcast %cst_38 : f32 to vector<16x64xf32>
    %137 = arith.addf %136, %135 : vector<16x64xf32>
    %138 = arith.mulf %127, %137 : vector<16x64xf32>
    %139 = arith.truncf %138 : vector<16x64xf32> to vector<16x64xbf16>
    %cst_39 = arith.constant dense<0.000000e+00> : vector<16x32xf32>
    %140 = tpu.matmul %139, %8, %cst_39 {dimension_numbers = #tpu.dot_dimension_numbers<[1], [0], [0], [1], [0, 0, 1, 1], [], []>} : vector<16x64xbf16>, vector<64x32xbf16>, vector<16x32xf32> -> vector<16x32xf32>
    %141 = vector.broadcast %16 : vector<1x32xf32> to vector<16x32xf32>
    %142 = arith.addf %140, %141 : vector<16x32xf32>
    %143 = arith.addf %121, %142 : vector<16x32xf32>
    %cst_40 = arith.constant dense<0.000000e+00> : vector<16xf32>
    %144 = vector.multi_reduction <add>, %143, %cst_40 [1] : vector<16x32xf32> to vector<16xf32>
    %145 = vector.shape_cast %144 : vector<16xf32> to vector<16x1xf32>
    %cst_41 = arith.constant 3.200000e+01 : f32
    %146 = vector.broadcast %cst_41 : f32 to vector<16x1xf32>
    %147 = arith.divf %145, %146 : vector<16x1xf32>
    %148 = vector.broadcast %147 : vector<16x1xf32> to vector<16x32xf32>
    %149 = arith.subf %143, %148 : vector<16x32xf32>
    %150 = arith.mulf %149, %149 : vector<16x32xf32>
    %cst_42 = arith.constant dense<0.000000e+00> : vector<16xf32>
    %151 = vector.multi_reduction <add>, %150, %cst_42 [1] : vector<16x32xf32> to vector<16xf32>
    %152 = vector.shape_cast %151 : vector<16xf32> to vector<16x1xf32>
    %cst_43 = arith.constant 3.200000e+01 : f32
    %153 = vector.broadcast %cst_43 : f32 to vector<16x1xf32>
    %154 = arith.divf %152, %153 : vector<16x1xf32>
    %155 = vector.broadcast %147 : vector<16x1xf32> to vector<16x32xf32>
    %156 = arith.subf %143, %155 : vector<16x32xf32>
    %cst_44 = arith.constant 9.99999996E-13 : f32
    %157 = vector.broadcast %cst_44 : f32 to vector<16x1xf32>
    %158 = arith.addf %154, %157 : vector<16x1xf32>
    %159 = math.rsqrt %158 : vector<16x1xf32>
    %160 = vector.broadcast %159 : vector<16x1xf32> to vector<16x32xf32>
    %161 = arith.mulf %156, %160 : vector<16x32xf32>
    %162 = vector.broadcast %17 : vector<1x32xf32> to vector<16x32xf32>
    %163 = arith.mulf %161, %162 : vector<16x32xf32>
    %164 = vector.broadcast %18 : vector<1x32xf32> to vector<16x32xf32>
    %165 = arith.addf %163, %164 : vector<16x32xf32>
    %166 = vector.extract_strided_slice %165 {offsets = [0, 0], sizes = [1, 32], strides = [1, 1]} : vector<16x32xf32> to vector<1x32xf32>
    %167 = vector.extract_strided_slice %165 {offsets = [8, 0], sizes = [1, 32], strides = [1, 1]} : vector<16x32xf32> to vector<1x32xf32>
    %168 = tpu.concatenate %166, %167 in 0 : vector<1x32xf32>, vector<1x32xf32> -> vector<2x32xf32>
    %169 = arith.truncf %168 : vector<2x32xf32> to vector<2x32xbf16>
    %cst_45 = arith.constant dense<0.000000e+00> : vector<2x32xf32>
    %170 = tpu.matmul %169, %6, %cst_45 {dimension_numbers = #tpu.dot_dimension_numbers<[1], [0], [0], [1], [0, 0, 1, 1], [], []>} : vector<2x32xbf16>, vector<32x32xbf16>, vector<2x32xf32> -> vector<2x32xf32>
    %171 = vector.broadcast %19 : vector<1x32xf32> to vector<2x32xf32>
    %172 = arith.addf %170, %171 : vector<2x32xf32>
    %173 = math.tanh %172 : vector<2x32xf32>
    %174 = arith.truncf %173 : vector<2x32xf32> to vector<2x32xbf16>
    %cst_46 = arith.constant dense<0.000000e+00> : vector<2x128xf32>
    %175 = tpu.matmul %174, %7, %cst_46 {dimension_numbers = #tpu.dot_dimension_numbers<[1], [0], [0], [1], [0, 0, 1, 1], [], []>} : vector<2x32xbf16>, vector<32x128xbf16>, vector<2x128xf32> -> vector<2x128xf32>
    %176 = vector.broadcast %20 : vector<1x128xf32> to vector<2x128xf32>
    %177 = arith.addf %175, %176 : vector<2x128xf32>
    %cst_47 = arith.constant 0.000000e+00 : f32
    %178 = vector.broadcast %cst_47 : f32 to vector<6x128xf32>
    %179 = tpu.concatenate %177, %178 in 0 : vector<2x128xf32>, vector<6x128xf32> -> vector<8x128xf32>
    %c0_48 = arith.constant 0 : index
    %c0_49 = arith.constant 0 : index
    %180 = vector.load %arg5[%c0_48, %c0_49] : memref<8x128xf32, #tpu.memory_space<vmem>>, vector<8x128xf32>
    tpu.vector_store %arg5[%c0_48, %c0_49], %179 {strides = array<i32>} : memref<8x128xf32, #tpu.memory_space<vmem>>, vector<8x128xf32>,
    return
  }
}

</mosaic_0001>

<llo_original>
// kernel: sentiment_forward.1
$region0: #{sentiment_forward.1}
  #allocation0 [shape = 'u32[]', space=smem, size = 0x4, offset = 0x4, fixed_abs, tag = 'smem constant byte address 0x4 - core index']
  #allocation1 [shape = 'u32[144,128]{1,0:T(1,128)}', space=vmem, size = 0x12000, scoped, tag = 'internal scratch']
  %s0 = inlined_call_operand.vmem [shape: f32[16,32], index: 0, kind: input, shape index: {}]
  %s1 = inlined_call_operand.vmem [shape: f32[2,8], index: 1, kind: input, shape index: {}]
  %s2 = inlined_call_operand.vmem [shape: bf16[32,640], index: 2, kind: input, shape index: {}]
  %s3 = inlined_call_operand.vmem [shape: bf16[64,32], index: 3, kind: input, shape index: {}]
  %s4 = inlined_call_operand.vmem [shape: f32[12,128], index: 4, kind: input, shape index: {}]
  %s5 = inlined_call_operand.vmem [shape: f32[8,128], index: 5, kind: output, shape index: {}]
  %s6 = sld [smem:[#allocation0]]
  $region30: #{sentiment_forward.1} parent=0
    _
  %s8 = ssub.s32 1, %s6
  %s9 = scalar_select 0, %s8, %s6
  // Predicated region
  $region2: #{sentiment_forward.1} parent=0 // pred_check
    _
  $region3: #{sentiment_forward.1} parent=0 // pred_check_branch
    %11 = sbr.rel (0) target = $region5
  $region4: #{sentiment_forward.1} parent=0 // pred_region
    _
  $region5: #{sentiment_forward.1} parent=0 // pred_fallthru
    _
  // Predicated region
  $region6: #{sentiment_forward.1} parent=0 // pred_check
    _
  $region7: #{sentiment_forward.1} parent=0 // pred_check_branch
    %13 = sbr.rel (0) target = $region9
  $region8: #{sentiment_forward.1} parent=0 // pred_region
    _
  $region9: #{sentiment_forward.1} parent=0 // pred_fallthru
    _
  // Predicated region
  $region10: #{sentiment_forward.1} parent=0 // pred_check
    _
  $region11: #{sentiment_forward.1} parent=0 // pred_check_branch
    %15 = sbr.rel (0) target = $region13
  $region12: #{sentiment_forward.1} parent=0 // pred_region
    _
  $region13: #{sentiment_forward.1} parent=0 // pred_fallthru
    _
  // Predicated region
  $region14: #{sentiment_forward.1} parent=0 // pred_check
    _
  $region15: #{sentiment_forward.1} parent=0 // pred_check_branch
    %17 = sbr.rel (0) target = $region17
  $region16: #{sentiment_forward.1} parent=0 // pred_region
    _
  $region17: #{sentiment_forward.1} parent=0 // pred_fallthru
    _
  // Predicated region
  $region18: #{sentiment_forward.1} parent=0 // pred_check
    _
  $region19: #{sentiment_forward.1} parent=0 // pred_check_branch
    %19 = sbr.rel (0) target = $region21
  $region20: #{sentiment_forward.1} parent=0 // pred_region
    _
  $region21: #{sentiment_forward.1} parent=0 // pred_fallthru
    _
  %v21 = vld [vmem:[%s0] sm:$0xff]
  %v22 = vld [vmem:[%s0 + $0x8] sm:$0xff]
  %v23 = vld [vmem:[%s1] sm:$0x3]
  %v24 = vld [vmem:[%s4] sm:$0xff]
  %v25 = vld [vmem:[%s4 + $0x8] sm:$0xf]
  %v26 = vld [vmem:[%s2] sm:$0xf]
  %v27 = vld [vmem:[%s2 + $0x14] sm:$0xf]
  %v28 = vld [vmem:[%s2 + $0x28] sm:$0xf]
  %v29 = vld [vmem:[%s2 + $0x3c] sm:$0xf]
  %v30 = vld [vmem:[%s2 + $0x4] sm:$0xf]
  %v31 = vld [vmem:[%s2 + $0x18] sm:$0xf]
  %v32 = vld [vmem:[%s2 + $0x2c] sm:$0xf]
  %v33 = vld [vmem:[%s2 + $0x40] sm:$0xf]
  %v34 = vld [vmem:[%s2 + $0x8] sm:$0xf]
  %v35 = vld [vmem:[%s2 + $0x1c] sm:$0xf]
  %v36 = vld [vmem:[%s2 + $0x30] sm:$0xf]
  %v37 = vld [vmem:[%s2 + $0x44] sm:$0xf]
  %v38 = vld [vmem:[%s2 + $0xc] sm:$0xf]
  %v39 = vld [vmem:[%s2 + $0x20] sm:$0xf]
  %v40 = vld [vmem:[%s2 + $0x34] sm:$0xf]
  %v41 = vld [vmem:[%s2 + $0x48] sm:$0xf]
  %v42 = vld [vmem:[%s2 + $0x10] sm:$0xf]
  %v43 = vld [vmem:[%s2 + $0x24] sm:$0xf]
  %v44 = vld [vmem:[%s2 + $0x38] sm:$0xf]
  %v45 = vld [vmem:[%s2 + $0x4c] sm:$0xf]
  %v46 = vld [vmem:[%s3] sm:$0xf]
  %v47 = vld [vmem:[%s3 + $0x4] sm:$0xf]
  %v48 = vld [vmem:[%s3 + $0x8] sm:$0xf]
  %v49 = vld [vmem:[%s3 + $0xc] sm:$0xf]
  %v50 = vld [vmem:[%s3 + $0x10] sm:$0xf]
  %v51 = vld [vmem:[%s3 + $0x14] sm:$0xf]
  %v52 = vld [vmem:[%s3 + $0x18] sm:$0xf]
  %v53 = vld [vmem:[%s3 + $0x1c] sm:$0xf]
  %vm54 = vcmask 261120
  %v55 = vsel %vm54, %v21, 0.0
  %56 = vadd.xlane.f32.xlu0 %v55
  %v57 = vpop.xlane.xlu0 %56
  %v58 = vsel %vm54, %v22, 0.0
  %59 = vadd.xlane.f32.xlu0 %v58
  %v60 = vpop.xlane.xlu0 %59
  %v61 = vrcp.pop 32.0
  %v62 = vmul.f32 %v57, %v61
  %v63 = vmul.f32 %v60, %v61
  %v64 = vsub.f32 %v21, %v62
  %v65 = vsub.f32 %v22, %v63
  %v66 = vmul.f32 %v64, %v64
  %v67 = vmul.f32 %v65, %v65
  %v68 = vsel %vm54, %v66, 0.0
  %69 = vadd.xlane.f32.xlu0 %v68
  %v70 = vpop.xlane.xlu0 %69
  %v71 = vsel %vm54, %v67, 0.0
  %72 = vadd.xlane.f32.xlu0 %v71
  %v73 = vpop.xlane.xlu0 %72
  %v74 = vmul.f32 %v70, %v61
  %v75 = vmul.f32 %v73, %v61
  %v76 = vadd.f32 %v74, 1e-12
  %v77 = vadd.f32 %v75, 1e-12
  %v78 = vrsqrt.pop %v76
  %v79 = vrsqrt.pop %v77
  %v80 = vmul.f32 %v64, %v78
  %v81 = vmul.f32 %v65, %v79
  %v82 = vlaneseq
  %v83 = vshrl.u32 %v82, 7
  %v84 = vsub.s32 0, %v83
  %v85 = vrot.slane %v24, %v84
  %v86 = vmul.f32 %v80, %v85
  %v87 = vmul.f32 %v81, %v85
  %v88 = vlaneseq
  %v89 = vshrl.u32 %v88, 7
  %v90 = vsub.s32 1, %v89
  %v91 = vrot.slane %v24, %v90
  %v92 = vadd.f32 %v86, %v91
  %v93 = vadd.f32 %v87, %v91
  %v94 = vpack.c.bf16 %v93, %v92
  %v95 = vlaneseq
  %v96 = vshrl.u32 %v95, 7
  %v97 = vsub.s32 2, %v96
  %v98 = vrot.slane %v24, %v97
  %v103 = vunpack.c.l.b16 %v26
  %v104 = vunpack.c.l.b16 %v27
  %v105 = vunpack.c.l.b16 %v28
  %v106 = vunpack.c.l.b16 %v29
  %v107 = vpack.c.b16 %v104, %v103
  %v108 = vpack.c.b16 %v106, %v105
  %v112 = vsel %vm54, %v94, 0
  %114 = vmatprep.subr.bf16.mxu0 0
  %115 = vmatpush1.bf16.msra.mxu0 0
  %116 = vmatprep.subr.bf16.mxu0 0
  %117 = vmatpush1.bf16.msra.mxu0 0
  %118 = vmatprep.subr.bf16.mxu0 0
  %119 = vmatpush1.bf16.msra.mxu0 0
  %120 = vmatprep.subr.bf16.mxu0 0
  %121 = vmatpush1.bf16.msra.mxu0 0
  %122 = vmatprep.subr.bf16.mxu0 0
  %123 = vmatpush1.bf16.msra.mxu0 0
  %124 = vmatprep.subr.bf16.mxu0 0
  %125 = vmatpush1.bf16.msra.mxu0 0
  %126 = vmatprep.subr.bf16.mxu0 0
  %127 = vmatpush1.bf16.msra.mxu0 %v108
  %128 = vmatprep.subr.bf16.mxu0 0
  %129 = vmatpush1.bf16.msra.mxu0 %v107
  %130 = vmatprep.subr.bf16.mxu0 0
  %131 = vmatpush2.bf16.msra.mxu0 0
  %132 = vmatprep.subr.bf16.mxu0 0
  %133 = vmatpush2.bf16.msra.mxu0 0
  %134 = vmatprep.subr.bf16.mxu0 0
  %135 = vmatpush2.bf16.msra.mxu0 0
  %136 = vmatprep.subr.bf16.mxu0 0
  %137 = vmatpush2.bf16.msra.mxu0 0
  %138 = vmatprep.subr.bf16.mxu0 0
  %139 = vmatpush2.bf16.msra.mxu0 0
  %140 = vmatprep.subr.bf16.mxu0 0
  %141 = vmatpush2.bf16.msra.mxu0 0
  %142 = vmatprep.subr.bf16.mxu0 0
  %143 = vmatpush2.bf16.msra.mxu0 0
  %144 = vmatprep.subr.bf16.mxu0 0
  %145 = vmatpush2.bf16.msra.mxu0 0
  %146 = vmatprep.mubr.bf16.mxu0 0
  %147 = vmatmul.mubr.bf16.gmra.mxu0 %v112
  %v148 = vpop.f32.mrf.mxu0
  %v149 = vadd.f32 %v98, %v148
  %v150 = vpop.f32.mrf.mxu0
  %v151 = vpop.f32.mrf.mxu0
  %v152 = vadd.f32 %v98, %v151
  %v153 = vpop.f32.mrf.mxu0
  %154 = vdwg.mxu0
  %v155 = vpack.c.bf16 %v152, %v149
  %v157 = vunpack.c.l.b16 %v155
  %v158 = vunpack.c.h.b16 %v155
  %v159 = vpack.c.b16 %v157, %v157
  %v160 = vpack.c.b16 %v158, %v158
  %v163 = vunpack.c.l.s4 1966171168
  %v164 = vunpack.c.0.s8 %v163
  %v165 = vlaneseq
  %v166 = vshrl.u32 %v165, 7
  %v167 = vsub.s32 %v164, %v166
  %v168 = vrot.slane %v23, %v167
  %v169 = vcombine.high %v168, %v168
  %v171 = vunpack.c.l.s4 1966171168
  %v172 = vunpack.c.0.s8 %v171
  %v173 = vlaneseq
  %v174 = vshrl.u32 %v173, 7
  %v175 = vsub.s32 %v172, %v174
  %v176 = vrot.slane %v168, %v175
  %v178 = vunpack.c.l.s4 1966171168
  %v179 = vunpack.c.0.s8 %v178
  %v180 = vlaneseq
  %v181 = vshrl.u32 %v180, 7
  %v182 = vsub.s32 %v179, %v181
  %v183 = vrot.slane %v169, %v182
  %v184 = vlaneseq
  %v185 = vshrl.u32 %v184, 7
  %v186 = vsub.s32 0, %v185
  %v187 = vrot.slane %v176, %v186
  %v188 = vlaneseq
  %v189 = vshrl.u32 %v188, 7
  %v190 = vsub.s32 0, %v189
  %v191 = vrot.slane %v183, %v190
  %194 = vrot.lane.b32.xlu0 %v159, 96
  %v195 = vpop.permute.xlu0 %194
  %vm196 = vcmask 130048
  %v198 = vsel %vm196, %v159, 0
  %v201 = vsel %vm196, %v195, 0
  %203 = vmatprep.subr.bf16.mxu0 0
  %204 = vmatpush1.bf16.xpose.msra.mxu0 0
  %205 = vmatprep.subr.bf16.mxu0 0
  %206 = vmatpush1.bf16.xpose.msra.mxu0 0
  %207 = vmatprep.subr.bf16.mxu0 0
  %208 = vmatpush1.bf16.xpose.msra.mxu0 0
  %209 = vmatprep.subr.bf16.mxu0 0
  %210 = vmatpush1.bf16.xpose.msra.mxu0 0
  %211 = vmatprep.subr.bf16.mxu0 0
  %212 = vmatpush1.bf16.xpose.msra.mxu0 0
  %213 = vmatprep.subr.bf16.mxu0 0
  %214 = vmatpush1.bf16.xpose.msra.mxu0 0
  %215 = vmatprep.subr.bf16.mxu0 0
  %216 = vmatpush1.bf16.xpose.msra.mxu0 0
  %217 = vmatprep.subr.bf16.mxu0 0
  %218 = vmatpush1.bf16.xpose.msra.mxu0 %v201
  %219 = vmatprep.subr.bf16.mxu0 0
  %220 = vmatpush2.bf16.xpose.msra.mxu0 0
  %221 = vmatprep.subr.bf16.mxu0 0
  %222 = vmatpush2.bf16.xpose.msra.mxu0 0
  %223 = vmatprep.subr.bf16.mxu0 0
  %224 = vmatpush2.bf16.xpose.msra.mxu0 0
  %225 = vmatprep.subr.bf16.mxu0 0
  %226 = vmatpush2.bf16.xpose.msra.mxu0 0
  %227 = vmatprep.subr.bf16.mxu0 0
  %228 = vmatpush2.bf16.xpose.msra.mxu0 0
  %229 = vmatprep.subr.bf16.mxu0 0
  %230 = vmatpush2.bf16.xpose.msra.mxu0 0
  %231 = vmatprep.subr.bf16.mxu0 0
  %232 = vmatpush2.bf16.xpose.msra.mxu0 0
  %233 = vmatprep.subr.bf16.mxu0 0
  %234 = vmatpush2.bf16.xpose.msra.mxu0 0
  %235 = vmatprep.mubr.bf16.mxu0 0
  %236 = vmatmul.mubr.bf16.gmra.mxu0 %v198
  %v237 = vpop.f32.mrf.mxu0
  %v238 = vadd.f32 %v187, %v237
  %v239 = vpop.f32.mrf.mxu0
  %v240 = vpop.f32.mrf.mxu0
  %v241 = vpop.f32.mrf.mxu0
  %242 = vdwg.mxu0
  %243 = vrot.lane.b32.xlu0 %v160, 96
  %v244 = vpop.permute.xlu0 %243
  %v246 = vsel %vm196, %v160, 0
  %v249 = vsel %vm196, %v244, 0
  %251 = vmatprep.subr.bf16.mxu0 0
  %252 = vmatpush1.bf16.xpose.msra.mxu0 0
  %253 = vmatprep.subr.bf16.mxu0 0
  %254 = vmatpush1.bf16.xpose.msra.mxu0 0
  %255 = vmatprep.subr.bf16.mxu0 0
  %256 = vmatpush1.bf16.xpose.msra.mxu0 0
  %257 = vmatprep.subr.bf16.mxu0 0
  %258 = vmatpush1.bf16.xpose.msra.mxu0 0
  %259 = vmatprep.subr.bf16.mxu0 0
  %260 = vmatpush1.bf16.xpose.msra.mxu0 0
  %261 = vmatprep.subr.bf16.mxu0 0
  %262 = vmatpush1.bf16.xpose.msra.mxu0 0
  %263 = vmatprep.subr.bf16.mxu0 0
  %264 = vmatpush1.bf16.xpose.msra.mxu0 0
  %265 = vmatprep.subr.bf16.mxu0 0
  %266 = vmatpush1.bf16.xpose.msra.mxu0 %v249
  %267 = vmatprep.subr.bf16.mxu0 0
  %268 = vmatpush2.bf16.xpose.msra.mxu0 0
  %269 = vmatprep.subr.bf16.mxu0 0
  %270 = vmatpush2.bf16.xpose.msra.mxu0 0
  %271 = vmatprep.subr.bf16.mxu0 0
  %272 = vmatpush2.bf16.xpose.msra.mxu0 0
  %273 = vmatprep.subr.bf16.mxu0 0
  %274 = vmatpush2.bf16.xpose.msra.mxu0 0
  %275 = vmatprep.subr.bf16.mxu0 0
  %276 = vmatpush2.bf16.xpose.msra.mxu0 0
  %277 = vmatprep.subr.bf16.mxu0 0
  %278 = vmatpush2.bf16.xpose.msra.mxu0 0
  %279 = vmatprep.subr.bf16.mxu0 0
  %280 = vmatpush2.bf16.xpose.msra.mxu0 0
  %281 = vmatprep.subr.bf16.mxu0 0
  %282 = vmatpush2.bf16.xpose.msra.mxu0 0
  %283 = vmatprep.mubr.bf16.mxu0 0
  %284 = vmatmul.mubr.bf16.gmra.mxu0 %v246
  %v285 = vpop.f32.mrf.mxu0
  %v286 = vadd.f32 %v191, %v285
  %v287 = vpop.f32.mrf.mxu0
  %v288 = vpop.f32.mrf.mxu0
  %v289 = vpop.f32.mrf.mxu0
  %290 = vdwg.mxu0
  %vm291 = vcmask 64512
  %v292 = vsel %vm291, %v238, -inf
  %293 = vmax.xlane.f32.xlu0 %v292
  %v294 = vpop.xlane.xlu0 %293
  %v295 = vsel %vm291, %v286, -inf
  %296 = vmax.xlane.f32.xlu0 %v295
  %v297 = vpop.xlane.xlu0 %296
  %v298 = vsub.f32 %v238, %v294
  %v299 = vsub.f32 %v286, %v297
  %v300 = vmul.f32 %v298, 1.442695
  %v301 = vpow.pop %v300
  %v302 = vmul.f32 %v299, 1.442695
  %v303 = vpow.pop %v302
  %v304 = vsel %vm291, %v301, 0.0
  %305 = vadd.xlane.f32.xlu0 %v304
  %v306 = vpop.xlane.xlu0 %305
  %v307 = vsel %vm291, %v303, 0.0
  %308 = vadd.xlane.f32.xlu0 %v307
  %v309 = vpop.xlane.xlu0 %308
  %v310 = vrcp.pop %v306
  %v311 = vrcp.pop %v309
  %v312 = vmul.f32 %v301, %v310
  %v313 = vmul.f32 %v303, %v311
  %v314 = vpack.c.bf16 %v312, %v312
  %v315 = vpack.c.bf16 %v313, %v313
  %316 = vrot.lane.b32.xlu0 %v159, 64
  %v317 = vpop.permute.xlu0 %316
  %v319 = vsel %vm291, %v314, 0
  %vm321 = vcmask 1043456
  %v323 = vsel %vm321, %v317, 0
  %325 = vmatprep.subr.bf16.mxu0 0
  %326 = vmatpush1.bf16.msra.mxu0 0
  %327 = vmatprep.subr.bf16.mxu0 0
  %328 = vmatpush1.bf16.msra.mxu0 0
  %329 = vmatprep.subr.bf16.mxu0 0
  %330 = vmatpush1.bf16.msra.mxu0 0
  %331 = vmatprep.subr.bf16.mxu0 0
  %332 = vmatpush1.bf16.msra.mxu0 0
  %333 = vmatprep.subr.bf16.mxu0 0
  %334 = vmatpush1.bf16.msra.mxu0 0
  %335 = vmatprep.subr.bf16.mxu0 0
  %336 = vmatpush1.bf16.msra.mxu0 0
  %337 = vmatprep.subr.bf16.mxu0 0
  %338 = vmatpush1.bf16.msra.mxu0 0
  %339 = vmatprep.subr.bf16.mxu0 0
  %340 = vmatpush1.bf16.msra.mxu0 %v323
  %341 = vmatprep.subr.bf16.mxu0 0
  %342 = vmatpush2.bf16.msra.mxu0 0
  %343 = vmatprep.subr.bf16.mxu0 0
  %344 = vmatpush2.bf16.msra.mxu0 0
  %345 = vmatprep.subr.bf16.mxu0 0
  %346 = vmatpush2.bf16.msra.mxu0 0
  %347 = vmatprep.subr.bf16.mxu0 0
  %348 = vmatpush2.bf16.msra.mxu0 0
  %349 = vmatprep.subr.bf16.mxu0 0
  %350 = vmatpush2.bf16.msra.mxu0 0
  %351 = vmatprep.subr.bf16.mxu0 0
  %352 = vmatpush2.bf16.msra.mxu0 0
  %353 = vmatprep.subr.bf16.mxu0 0
  %354 = vmatpush2.bf16.msra.mxu0 0
  %355 = vmatprep.subr.bf16.mxu0 0
  %356 = vmatpush2.bf16.msra.mxu0 0
  %357 = vmatprep.mubr.bf16.mxu0 0
  %358 = vmatmul.mubr.bf16.gmra.mxu0 %v319
  %v359 = vpop.f32.mrf.mxu0
  %v360 = vadd.f32 0.0, %v359
  %v361 = vpop.f32.mrf.mxu0
  %v362 = vpop.f32.mrf.mxu0
  %v363 = vpop.f32.mrf.mxu0
  %364 = vdwg.mxu0
  %365 = vrot.lane.b32.xlu0 %v160, 64
  %v366 = vpop.permute.xlu0 %365
  %v368 = vsel %vm291, %v315, 0
  %v371 = vsel %vm321, %v366, 0
  %373 = vmatprep.subr.bf16.mxu0 0
  %374 = vmatpush1.bf16.msra.mxu0 0
  %375 = vmatprep.subr.bf16.mxu0 0
  %376 = vmatpush1.bf16.msra.mxu0 0
  %377 = vmatprep.subr.bf16.mxu0 0
  %378 = vmatpush1.bf16.msra.mxu0 0
  %379 = vmatprep.subr.bf16.mxu0 0
  %380 = vmatpush1.bf16.msra.mxu0 0
  %381 = vmatprep.subr.bf16.mxu0 0
  %382 = vmatpush1.bf16.msra.mxu0 0
  %383 = vmatprep.subr.bf16.mxu0 0
  %384 = vmatpush1.bf16.msra.mxu0 0
  %385 = vmatprep.subr.bf16.mxu0 0
  %386 = vmatpush1.bf16.msra.mxu0 0
  %387 = vmatprep.subr.bf16.mxu0 0
  %388 = vmatpush1.bf16.msra.mxu0 %v371
  %389 = vmatprep.subr.bf16.mxu0 0
  %390 = vmatpush2.bf16.msra.mxu0 0
  %391 = vmatprep.subr.bf16.mxu0 0
  %392 = vmatpush2.bf16.msra.mxu0 0
  %393 = vmatprep.subr.bf16.mxu0 0
  %394 = vmatpush2.bf16.msra.mxu0 0
  %395 = vmatprep.subr.bf16.mxu0 0
  %396 = vmatpush2.bf16.msra.mxu0 0
  %397 = vmatprep.subr.bf16.mxu0 0
  %398 = vmatpush2.bf16.msra.mxu0 0
  %399 = vmatprep.subr.bf16.mxu0 0
  %400 = vmatpush2.bf16.msra.mxu0 0
  %401 = vmatprep.subr.bf16.mxu0 0
  %402 = vmatpush2.bf16.msra.mxu0 0
  %403 = vmatprep.subr.bf16.mxu0 0
  %404 = vmatpush2.bf16.msra.mxu0 0
  %405 = vmatprep.mubr.bf16.mxu0 0
  %406 = vmatmul.mubr.bf16.gmra.mxu0 %v368
  %v407 = vpop.f32.mrf.mxu0
  %v408 = vadd.f32 0.0, %v407
  %v409 = vpop.f32.mrf.mxu0
  %v410 = vpop.f32.mrf.mxu0
  %v411 = vpop.f32.mrf.mxu0
  %412 = vdwg.mxu0
  %v413 = vpack.c.bf16 %v408, %v360
  %414 = vrot.lane.b32.xlu0 %v159, 112
  %v415 = vpop.permute.xlu0 %414
  %416 = vrot.lane.b32.xlu0 %v159, 80
  %v417 = vpop.permute.xlu0 %416
  %v419 = vsel %vm196, %v415, 0
  %v422 = vsel %vm196, %v417, 0
  %424 = vmatprep.subr.bf16.mxu0 0
  %425 = vmatpush1.bf16.xpose.msra.mxu0 0
  %426 = vmatprep.subr.bf16.mxu0 0
  %427 = vmatpush1.bf16.xpose.msra.mxu0 0
  %428 = vmatprep.subr.bf16.mxu0 0
  %429 = vmatpush1.bf16.xpose.msra.mxu0 0
  %430 = vmatprep.subr.bf16.mxu0 0
  %431 = vmatpush1.bf16.xpose.msra.mxu0 0
  %432 = vmatprep.subr.bf16.mxu0 0
  %433 = vmatpush1.bf16.xpose.msra.mxu0 0
  %434 = vmatprep.subr.bf16.mxu0 0
  %435 = vmatpush1.bf16.xpose.msra.mxu0 0
  %436 = vmatprep.subr.bf16.mxu0 0
  %437 = vmatpush1.bf16.xpose.msra.mxu0 0
  %438 = vmatprep.subr.bf16.mxu0 0
  %439 = vmatpush1.bf16.xpose.msra.mxu0 %v422
  %440 = vmatprep.subr.bf16.mxu0 0
  %441 = vmatpush2.bf16.xpose.msra.mxu0 0
  %442 = vmatprep.subr.bf16.mxu0 0
  %443 = vmatpush2.bf16.xpose.msra.mxu0 0
  %444 = vmatprep.subr.bf16.mxu0 0
  %445 = vmatpush2.bf16.xpose.msra.mxu0 0
  %446 = vmatprep.subr.bf16.mxu0 0
  %447 = vmatpush2.bf16.xpose.msra.mxu0 0
  %448 = vmatprep.subr.bf16.mxu0 0
  %449 = vmatpush2.bf16.xpose.msra.mxu0 0
  %450 = vmatprep.subr.bf16.mxu0 0
  %451 = vmatpush2.bf16.xpose.msra.mxu0 0
  %452 = vmatprep.subr.bf16.mxu0 0
  %453 = vmatpush2.bf16.xpose.msra.mxu0 0
  %454 = vmatprep.subr.bf16.mxu0 0
  %455 = vmatpush2.bf16.xpose.msra.mxu0 0
  %456 = vmatprep.mubr.bf16.mxu0 0
  %457 = vmatmul.mubr.bf16.gmra.mxu0 %v419
  %v458 = vpop.f32.mrf.mxu0
  %v459 = vadd.f32 %v187, %v458
  %v460 = vpop.f32.mrf.mxu0
  %v461 = vpop.f32.mrf.mxu0
  %v462 = vpop.f32.mrf.mxu0
  %463 = vdwg.mxu0
  %464 = vrot.lane.b32.xlu0 %v160, 112
  %v465 = vpop.permute.xlu0 %464
  %466 = vrot.lane.b32.xlu0 %v160, 80
  %v467 = vpop.permute.xlu0 %466
  %v469 = vsel %vm196, %v465, 0
  %v472 = vsel %vm196, %v467, 0
  %474 = vmatprep.subr.bf16.mxu0 0
  %475 = vmatpush1.bf16.xpose.msra.mxu0 0
  %476 = vmatprep.subr.bf16.mxu0 0
  %477 = vmatpush1.bf16.xpose.msra.mxu0 0
  %478 = vmatprep.subr.bf16.mxu0 0
  %479 = vmatpush1.bf16.xpose.msra.mxu0 0
  %480 = vmatprep.subr.bf16.mxu0 0
  %481 = vmatpush1.bf16.xpose.msra.mxu0 0
  %482 = vmatprep.subr.bf16.mxu0 0
  %483 = vmatpush1.bf16.xpose.msra.mxu0 0
  %484 = vmatprep.subr.bf16.mxu0 0
  %485 = vmatpush1.bf16.xpose.msra.mxu0 0
  %486 = vmatprep.subr.bf16.mxu0 0
  %487 = vmatpush1.bf16.xpose.msra.mxu0 0
  %488 = vmatprep.subr.bf16.mxu0 0
  %489 = vmatpush1.bf16.xpose.msra.mxu0 %v472
  %490 = vmatprep.subr.bf16.mxu0 0
  %491 = vmatpush2.bf16.xpose.msra.mxu0 0
  %492 = vmatprep.subr.bf16.mxu0 0
  %493 = vmatpush2.bf16.xpose.msra.mxu0 0
  %494 = vmatprep.subr.bf16.mxu0 0
  %495 = vmatpush2.bf16.xpose.msra.mxu0 0
  %496 = vmatprep.subr.bf16.mxu0 0
  %497 = vmatpush2.bf16.xpose.msra.mxu0 0
  %498 = vmatprep.subr.bf16.mxu0 0
  %499 = vmatpush2.bf16.xpose.msra.mxu0 0
  %500 = vmatprep.subr.bf16.mxu0 0
  %501 = vmatpush2.bf16.xpose.msra.mxu0 0
  %502 = vmatprep.subr.bf16.mxu0 0
  %503 = vmatpush2.bf16.xpose.msra.mxu0 0
  %504 = vmatprep.subr.bf16.mxu0 0
  %505 = vmatpush2.bf16.xpose.msra.mxu0 0
  %506 = vmatprep.mubr.bf16.mxu0 0
  %507 = vmatmul.mubr.bf16.gmra.mxu0 %v469
  %v508 = vpop.f32.mrf.mxu0
  %v509 = vadd.f32 %v191, %v508
  %v510 = vpop.f32.mrf.mxu0
  %v511 = vpop.f32.mrf.mxu0
  %v512 = vpop.f32.mrf.mxu0
  %513 = vdwg.mxu0
  %v514 = vsel %vm291, %v459, -inf
  %515 = vmax.xlane.f32.xlu0 %v514
  %v516 = vpop.xlane.xlu0 %515
  %v517 = vsel %vm291, %v509, -inf
  %518 = vmax.xlane.f32.xlu0 %v517
  %v519 = vpop.xlane.xlu0 %518
  %v520 = vsub.f32 %v459, %v516
  %v521 = vsub.f32 %v509, %v519
  %v522 = vmul.f32 %v520, 1.442695
  %v523 = vpow.pop %v522
  %v524 = vmul.f32 %v521, 1.442695
  %v525 = vpow.pop %v524
  %v526 = vsel %vm291, %v523, 0.0
  %527 = vadd.xlane.f32.xlu0 %v526
  %v528 = vpop.xlane.xlu0 %527
  %v529 = vsel %vm291, %v525, 0.0
  %530 = vadd.xlane.f32.xlu0 %v529
  %v531 = vpop.xlane.xlu0 %530
  %v532 = vrcp.pop %v528
  %v533 = vrcp.pop %v531
  %v534 = vmul.f32 %v523, %v532
  %v535 = vmul.f32 %v525, %v533
  %v536 = vpack.c.bf16 %v534, %v534
  %v537 = vpack.c.bf16 %v535, %v535
  %538 = vrot.lane.b32.xlu0 %v159, 48
  %v539 = vpop.permute.xlu0 %538
  %v541 = vsel %vm291, %v536, 0
  %v544 = vsel %vm321, %v539, 0
  %546 = vmatprep.subr.bf16.mxu0 0
  %547 = vmatpush1.bf16.msra.mxu0 0
  %548 = vmatprep.subr.bf16.mxu0 0
  %549 = vmatpush1.bf16.msra.mxu0 0
  %550 = vmatprep.subr.bf16.mxu0 0
  %551 = vmatpush1.bf16.msra.mxu0 0
  %552 = vmatprep.subr.bf16.mxu0 0
  %553 = vmatpush1.bf16.msra.mxu0 0
  %554 = vmatprep.subr.bf16.mxu0 0
  %555 = vmatpush1.bf16.msra.mxu0 0
  %556 = vmatprep.subr.bf16.mxu0 0
  %557 = vmatpush1.bf16.msra.mxu0 0
  %558 = vmatprep.subr.bf16.mxu0 0
  %559 = vmatpush1.bf16.msra.mxu0 0
  %560 = vmatprep.subr.bf16.mxu0 0
  %561 = vmatpush1.bf16.msra.mxu0 %v544
  %562 = vmatprep.subr.bf16.mxu0 0
  %563 = vmatpush2.bf16.msra.mxu0 0
  %564 = vmatprep.subr.bf16.mxu0 0
  %565 = vmatpush2.bf16.msra.mxu0 0
  %566 = vmatprep.subr.bf16.mxu0 0
  %567 = vmatpush2.bf16.msra.mxu0 0
  %568 = vmatprep.subr.bf16.mxu0 0
  %569 = vmatpush2.bf16.msra.mxu0 0
  %570 = vmatprep.subr.bf16.mxu0 0
  %571 = vmatpush2.bf16.msra.mxu0 0
  %572 = vmatprep.subr.bf16.mxu0 0
  %573 = vmatpush2.bf16.msra.mxu0 0
  %574 = vmatprep.subr.bf16.mxu0 0
  %575 = vmatpush2.bf16.msra.mxu0 0
  %576 = vmatprep.subr.bf16.mxu0 0
  %577 = vmatpush2.bf16.msra.mxu0 0
  %578 = vmatprep.mubr.bf16.mxu0 0
  %579 = vmatmul.mubr.bf16.gmra.mxu0 %v541
  %v580 = vpop.f32.mrf.mxu0
  %v581 = vadd.f32 0.0, %v580
  %v582 = vpop.f32.mrf.mxu0
  %v583 = vpop.f32.mrf.mxu0
  %v584 = vpop.f32.mrf.mxu0
  %585 = vdwg.mxu0
  %586 = vrot.lane.b32.xlu0 %v160, 48
  %v587 = vpop.permute.xlu0 %586
  %v589 = vsel %vm291, %v537, 0
  %v592 = vsel %vm321, %v587, 0
  %594 = vmatprep.subr.bf16.mxu0 0
  %595 = vmatpush1.bf16.msra.mxu0 0
  %596 = vmatprep.subr.bf16.mxu0 0
  %597 = vmatpush1.bf16.msra.mxu0 0
  %598 = vmatprep.subr.bf16.mxu0 0
  %599 = vmatpush1.bf16.msra.mxu0 0
  %600 = vmatprep.subr.bf16.mxu0 0
  %601 = vmatpush1.bf16.msra.mxu0 0
  %602 = vmatprep.subr.bf16.mxu0 0
  %603 = vmatpush1.bf16.msra.mxu0 0
  %604 = vmatprep.subr.bf16.mxu0 0
  %605 = vmatpush1.bf16.msra.mxu0 0
  %606 = vmatprep.subr.bf16.mxu0 0
  %607 = vmatpush1.bf16.msra.mxu0 0
  %608 = vmatprep.subr.bf16.mxu0 0
  %609 = vmatpush1.bf16.msra.mxu0 %v592
  %610 = vmatprep.subr.bf16.mxu0 0
  %611 = vmatpush2.bf16.msra.mxu0 0
  %612 = vmatprep.subr.bf16.mxu0 0
  %613 = vmatpush2.bf16.msra.mxu0 0
  %614 = vmatprep.subr.bf16.mxu0 0
  %615 = vmatpush2.bf16.msra.mxu0 0
  %616 = vmatprep.subr.bf16.mxu0 0
  %617 = vmatpush2.bf16.msra.mxu0 0
  %618 = vmatprep.subr.bf16.mxu0 0
  %619 = vmatpush2.bf16.msra.mxu0 0
  %620 = vmatprep.subr.bf16.mxu0 0
  %621 = vmatpush2.bf16.msra.mxu0 0
  %622 = vmatprep.subr.bf16.mxu0 0
  %623 = vmatpush2.bf16.msra.mxu0 0
  %624 = vmatprep.subr.bf16.mxu0 0
  %625 = vmatpush2.bf16.msra.mxu0 0
  %626 = vmatprep.mubr.bf16.mxu0 0
  %627 = vmatmul.mubr.bf16.gmra.mxu0 %v589
  %v628 = vpop.f32.mrf.mxu0
  %v629 = vadd.f32 0.0, %v628
  %v630 = vpop.f32.mrf.mxu0
  %v631 = vpop.f32.mrf.mxu0
  %v632 = vpop.f32.mrf.mxu0
  %633 = vdwg.mxu0
  %v634 = vpack.c.bf16 %v629, %v581
  %v637 = vunpack.c.l.b16 %v32
  %v638 = vunpack.c.l.b16 %v33
  %v639 = vpack.c.b16 %v638, %v637
  %v642 = vsel %vm196, %v634, 0
  %644 = vmatprep.subr.bf16.mxu0 0
  %645 = vmatpush1.bf16.msra.mxu0 0
  %646 = vmatprep.subr.bf16.mxu0 0
  %647 = vmatpush1.bf16.msra.mxu0 0
  %648 = vmatprep.subr.bf16.mxu0 0
  %649 = vmatpush1.bf16.msra.mxu0 0
  %650 = vmatprep.subr.bf16.mxu0 0
  %651 = vmatpush1.bf16.msra.mxu0 0
  %652 = vmatprep.subr.bf16.mxu0 0
  %653 = vmatpush1.bf16.msra.mxu0 0
  %654 = vmatprep.subr.bf16.mxu0 0
  %655 = vmatpush1.bf16.msra.mxu0 0
  %656 = vmatprep.subr.bf16.mxu0 0
  %657 = vmatpush1.bf16.msra.mxu0 0
  %658 = vmatprep.subr.bf16.mxu0 0
  %659 = vmatpush1.bf16.msra.mxu0 %v639
  %660 = vmatprep.subr.bf16.mxu0 0
  %661 = vmatpush2.bf16.msra.mxu0 0
  %662 = vmatprep.subr.bf16.mxu0 0
  %663 = vmatpush2.bf16.msra.mxu0 0
  %664 = vmatprep.subr.bf16.mxu0 0
  %665 = vmatpush2.bf16.msra.mxu0 0
  %666 = vmatprep.subr.bf16.mxu0 0
  %667 = vmatpush2.bf16.msra.mxu0 0
  %668 = vmatprep.subr.bf16.mxu0 0
  %669 = vmatpush2.bf16.msra.mxu0 0
  %670 = vmatprep.subr.bf16.mxu0 0
  %671 = vmatpush2.bf16.msra.mxu0 0
  %672 = vmatprep.subr.bf16.mxu0 0
  %673 = vmatpush2.bf16.msra.mxu0 0
  %674 = vmatprep.subr.bf16.mxu0 0
  %675 = vmatpush2.bf16.msra.mxu0 0
  %676 = vmatprep.mubr.bf16.mxu0 0
  %677 = vmatmul.mubr.bf16.gmra.mxu0 %v642
  %v678 = vpop.f32.mrf.mxu0
  %v679 = vadd.f32 0.0, %v678
  %v680 = vpop.f32.mrf.mxu0
  %v681 = vpop.f32.mrf.mxu0
  %v682 = vadd.f32 0.0, %v681
  %v683 = vpop.f32.mrf.mxu0
  %684 = vdwg.mxu0
  %v687 = vunpack.c.l.b16 %v30
  %v688 = vunpack.c.l.b16 %v31
  %v689 = vpack.c.b16 %v688, %v687
  %v692 = vsel %vm196, %v413, 0
  %694 = vmatprep.subr.bf16.mxu0 0
  %695 = vmatpush1.bf16.msra.mxu0 0
  %696 = vmatprep.subr.bf16.mxu0 0
  %697 = vmatpush1.bf16.msra.mxu0 0
  %698 = vmatprep.subr.bf16.mxu0 0
  %699 = vmatpush1.bf16.msra.mxu0 0
  %700 = vmatprep.subr.bf16.mxu0 0
  %701 = vmatpush1.bf16.msra.mxu0 0
  %702 = vmatprep.subr.bf16.mxu0 0
  %703 = vmatpush1.bf16.msra.mxu0 0
  %704 = vmatprep.subr.bf16.mxu0 0
  %705 = vmatpush1.bf16.msra.mxu0 0
  %706 = vmatprep.subr.bf16.mxu0 0
  %707 = vmatpush1.bf16.msra.mxu0 0
  %708 = vmatprep.subr.bf16.mxu0 0
  %709 = vmatpush1.bf16.msra.mxu0 %v689
  %710 = vmatprep.subr.bf16.mxu0 0
  %711 = vmatpush2.bf16.msra.mxu0 0
  %712 = vmatprep.subr.bf16.mxu0 0
  %713 = vmatpush2.bf16.msra.mxu0 0
  %714 = vmatprep.subr.bf16.mxu0 0
  %715 = vmatpush2.bf16.msra.mxu0 0
  %716 = vmatprep.subr.bf16.mxu0 0
  %717 = vmatpush2.bf16.msra.mxu0 0
  %718 = vmatprep.subr.bf16.mxu0 0
  %719 = vmatpush2.bf16.msra.mxu0 0
  %720 = vmatprep.subr.bf16.mxu0 0
  %721 = vmatpush2.bf16.msra.mxu0 0
  %722 = vmatprep.subr.bf16.mxu0 0
  %723 = vmatpush2.bf16.msra.mxu0 0
  %724 = vmatprep.subr.bf16.mxu0 0
  %725 = vmatpush2.bf16.msra.mxu0 0
  %726 = vmatprep.mubr.bf16.mxu0 0
  %727 = vmatmul.mubr.bf16.gmra.mxu0 %v692
  %v728 = vpop.f32.mrf.mxu0
  %v729 = vadd.f32 %v679, %v728
  %v730 = vpop.f32.mrf.mxu0
  %v731 = vpop.f32.mrf.mxu0
  %v732 = vadd.f32 %v682, %v731
  %v733 = vpop.f32.mrf.mxu0
  %734 = vdwg.mxu0
  %v735 = vlaneseq
  %v736 = vshrl.u32 %v735, 7
  %v737 = vsub.s32 3, %v736
  %v738 = vrot.slane %v24, %v737
  %v739 = vadd.f32 %v729, %v738
  %v740 = vadd.f32 %v732, %v738
  %v741 = vadd.f32 %v92, %v739
  %v742 = vadd.f32 %v93, %v740
  %v743 = vsel %vm54, %v741, 0.0
  %744 = vadd.xlane.f32.xlu0 %v743
  %v745 = vpop.xlane.xlu0 %744
  %v746 = vsel %vm54, %v742, 0.0
  %747 = vadd.xlane.f32.xlu0 %v746
  %v748 = vpop.xlane.xlu0 %747
  %v749 = vmul.f32 %v745, %v61
  %v750 = vmul.f32 %v748, %v61
  %v751 = vsub.f32 %v741, %v749
  %v752 = vsub.f32 %v742, %v750
  %v753 = vmul.f32 %v751, %v751
  %v754 = vmul.f32 %v752, %v752
  %v755 = vsel %vm54, %v753, 0.0
  %756 = vadd.xlane.f32.xlu0 %v755
  %v757 = vpop.xlane.xlu0 %756
  %v758 = vsel %vm54, %v754, 0.0
  %759 = vadd.xlane.f32.xlu0 %v758
  %v760 = vpop.xlane.xlu0 %759
  %v761 = vmul.f32 %v757, %v61
  %v762 = vmul.f32 %v760, %v61
  %v763 = vadd.f32 %v761, 1e-12
  %v764 = vadd.f32 %v762, 1e-12
  %v765 = vrsqrt.pop %v763
  %v766 = vrsqrt.pop %v764
  %v767 = vmul.f32 %v751, %v765
  %v768 = vmul.f32 %v752, %v766
  %v769 = vlaneseq
  %v770 = vshrl.u32 %v769, 7
  %v771 = vsub.s32 4, %v770
  %v772 = vrot.slane %v24, %v771
  %v773 = vmul.f32 %v767, %v772
  %v774 = vmul.f32 %v768, %v772
  %v775 = vlaneseq
  %v776 = vshrl.u32 %v775, 7
  %v777 = vsub.s32 5, %v776
  %v778 = vrot.slane %v24, %v777
  %v779 = vadd.f32 %v773, %v778
  %v780 = vadd.f32 %v774, %v778
  %v781 = vpack.c.bf16 %v780, %v779
  %v782 = vlaneseq
  %v783 = vshrl.u32 %v782, 7
  %v784 = vsub.s32 6, %v783
  %v785 = vrot.slane %v24, %v784
  %v790 = vunpack.c.l.b16 %v34
  %v791 = vunpack.c.l.b16 %v35
  %v792 = vunpack.c.l.b16 %v36
  %v793 = vunpack.c.l.b16 %v37
  %v794 = vpack.c.b16 %v791, %v790
  %v795 = vpack.c.b16 %v793, %v792
  %v799 = vsel %vm54, %v781, 0
  %801 = vmatprep.subr.bf16.mxu0 0
  %802 = vmatpush1.bf16.msra.mxu0 0
  %803 = vmatprep.subr.bf16.mxu0 0
  %804 = vmatpush1.bf16.msra.mxu0 0
  %805 = vmatprep.subr.bf16.mxu0 0
  %806 = vmatpush1.bf16.msra.mxu0 0
  %807 = vmatprep.subr.bf16.mxu0 0
  %808 = vmatpush1.bf16.msra.mxu0 0
  %809 = vmatprep.subr.bf16.mxu0 0
  %810 = vmatpush1.bf16.msra.mxu0 0
  %811 = vmatprep.subr.bf16.mxu0 0
  %812 = vmatpush1.bf16.msra.mxu0 0
  %813 = vmatprep.subr.bf16.mxu0 0
  %814 = vmatpush1.bf16.msra.mxu0 %v795
  %815 = vmatprep.subr.bf16.mxu0 0
  %816 = vmatpush1.bf16.msra.mxu0 %v794
  %817 = vmatprep.subr.bf16.mxu0 0
  %818 = vmatpush2.bf16.msra.mxu0 0
  %819 = vmatprep.subr.bf16.mxu0 0
  %820 = vmatpush2.bf16.msra.mxu0 0
  %821 = vmatprep.subr.bf16.mxu0 0
  %822 = vmatpush2.bf16.msra.mxu0 0
  %823 = vmatprep.subr.bf16.mxu0 0
  %824 = vmatpush2.bf16.msra.mxu0 0
  %825 = vmatprep.subr.bf16.mxu0 0
  %826 = vmatpush2.bf16.msra.mxu0 0
  %827 = vmatprep.subr.bf16.mxu0 0
  %828 = vmatpush2.bf16.msra.mxu0 0
  %829 = vmatprep.subr.bf16.mxu0 0
  %830 = vmatpush2.bf16.msra.mxu0 0
  %831 = vmatprep.subr.bf16.mxu0 0
  %832 = vmatpush2.bf16.msra.mxu0 0
  %833 = vmatprep.mubr.bf16.mxu0 0
  %834 = vmatmul.mubr.bf16.gmra.mxu0 %v799
  %v835 = vpop.f32.mrf.mxu0
  %v836 = vadd.f32 %v785, %v835
  %v837 = vpop.f32.mrf.mxu0
  %v838 = vpop.f32.mrf.mxu0
  %v839 = vadd.f32 %v785, %v838
  %v840 = vpop.f32.mrf.mxu0
  %841 = vdwg.mxu0
  %v842 = vmul.f32 %v836, 0.5
  %v843 = vmul.f32 %v839, 0.5
  %v844 = vmul.f32 %v836, 0.044715
  %v845 = vmul.f32 %v839, 0.044715
  %v846 = vmul.f32 %v844, %v836
  %v847 = vmul.f32 %v845, %v839
  %v848 = vmul.f32 %v846, %v836
  %v849 = vmul.f32 %v847, %v839
  %v850 = vadd.f32 %v836, %v848
  %v851 = vadd.f32 %v839, %v849
  %v852 = vmul.f32 %v850, 0.7978846
  %v853 = vmul.f32 %v851, 0.7978846
  %v854 = vtanh.pop %v852
  %v855 = vtanh.pop %v853
  %v856 = vadd.f32 %v854, 1.0
  %v857 = vadd.f32 %v855, 1.0
  %v858 = vmul.f32 %v842, %v856
  %v859 = vmul.f32 %v843, %v857
  %v860 = vpack.c.bf16 %v859, %v858
  %v861 = vlaneseq
  %v862 = vshrl.u32 %v861, 7
  %v863 = vsub.s32 7, %v862
  %v864 = vrot.slane %v24, %v863
  %v873 = vunpack.c.l.b16 %v46
  %v874 = vunpack.c.l.b16 %v47
  %v875 = vunpack.c.l.b16 %v48
  %v876 = vunpack.c.l.b16 %v49
  %v877 = vunpack.c.l.b16 %v50
  %v878 = vunpack.c.l.b16 %v51
  %v879 = vunpack.c.l.b16 %v52
  %v880 = vunpack.c.l.b16 %v53
  %v881 = vpack.c.b16 %v874, %v873
  %v882 = vpack.c.b16 %v876, %v875
  %v883 = vpack.c.b16 %v878, %v877
  %v884 = vpack.c.b16 %v880, %v879
  %vm889 = vcmask 523264
  %v891 = vsel %vm889, %v860, 0
  %893 = vmatprep.subr.bf16.mxu0 0
  %894 = vmatpush1.bf16.msra.mxu0 0
  %895 = vmatprep.subr.bf16.mxu0 0
  %896 = vmatpush1.bf16.msra.mxu0 0
  %897 = vmatprep.subr.bf16.mxu0 0
  %898 = vmatpush1.bf16.msra.mxu0 0
  %899 = vmatprep.subr.bf16.mxu0 0
  %900 = vmatpush1.bf16.msra.mxu0 0
  %901 = vmatprep.subr.bf16.mxu0 0
  %902 = vmatpush1.bf16.msra.mxu0 %v884
  %903 = vmatprep.subr.bf16.mxu0 0
  %904 = vmatpush1.bf16.msra.mxu0 %v883
  %905 = vmatprep.subr.bf16.mxu0 0
  %906 = vmatpush1.bf16.msra.mxu0 %v882
  %907 = vmatprep.subr.bf16.mxu0 0
  %908 = vmatpush1.bf16.msra.mxu0 %v881
  %909 = vmatprep.subr.bf16.mxu0 0
  %910 = vmatpush2.bf16.msra.mxu0 0
  %911 = vmatprep.subr.bf16.mxu0 0
  %912 = vmatpush2.bf16.msra.mxu0 0
  %913 = vmatprep.subr.bf16.mxu0 0
  %914 = vmatpush2.bf16.msra.mxu0 0
  %915 = vmatprep.subr.bf16.mxu0 0
  %916 = vmatpush2.bf16.msra.mxu0 0
  %917 = vmatprep.subr.bf16.mxu0 0
  %918 = vmatpush2.bf16.msra.mxu0 0
  %919 = vmatprep.subr.bf16.mxu0 0
  %920 = vmatpush2.bf16.msra.mxu0 0
  %921 = vmatprep.subr.bf16.mxu0 0
  %922 = vmatpush2.bf16.msra.mxu0 0
  %923 = vmatprep.subr.bf16.mxu0 0
  %924 = vmatpush2.bf16.msra.mxu0 0
  %925 = vmatprep.mubr.bf16.mxu0 0
  %926 = vmatmul.mubr.bf16.gmra.mxu0 %v891
  %v927 = vpop.f32.mrf.mxu0
  %v928 = vadd.f32 %v864, %v927
  %v929 = vpop.f32.mrf.mxu0
  %v930 = vpop.f32.mrf.mxu0
  %v931 = vadd.f32 %v864, %v930
  %v932 = vpop.f32.mrf.mxu0
  %933 = vdwg.mxu0
  %v934 = vadd.f32 %v779, %v928
  %v935 = vadd.f32 %v780, %v931
  %v936 = vsel %vm54, %v934, 0.0
  %937 = vadd.xlane.f32.xlu0 %v936
  %v938 = vpop.xlane.xlu0 %937
  %v939 = vsel %vm54, %v935, 0.0
  %940 = vadd.xlane.f32.xlu0 %v939
  %v941 = vpop.xlane.xlu0 %940
  %v942 = vmul.f32 %v938, %v61
  %v943 = vmul.f32 %v941, %v61
  %v944 = vsub.f32 %v934, %v942
  %v945 = vsub.f32 %v935, %v943
  %v946 = vmul.f32 %v944, %v944
  %v947 = vmul.f32 %v945, %v945
  %v948 = vsel %vm54, %v946, 0.0
  %949 = vadd.xlane.f32.xlu0 %v948
  %v950 = vpop.xlane.xlu0 %949
  %v951 = vsel %vm54, %v947, 0.0
  %952 = vadd.xlane.f32.xlu0 %v951
  %v953 = vpop.xlane.xlu0 %952
  %v954 = vmul.f32 %v950, %v61
  %v955 = vmul.f32 %v953, %v61
  %v956 = vadd.f32 %v954, 1e-12
  %v957 = vadd.f32 %v955, 1e-12
  %v958 = vrsqrt.pop %v956
  %v959 = vrsqrt.pop %v957
  %v960 = vmul.f32 %v944, %v958
  %v961 = vmul.f32 %v945, %v959
  %v962 = vlaneseq
  %v963 = vshrl.u32 %v962, 7
  %v964 = vsub.s32 0, %v963
  %v965 = vrot.slane %v25, %v964
  %v966 = vmul.f32 %v960, %v965
  %v967 = vmul.f32 %v961, %v965
  %v968 = vlaneseq
  %v969 = vshrl.u32 %v968, 7
  %v970 = vsub.s32 1, %v969
  %v971 = vrot.slane %v25, %v970
  %v972 = vadd.f32 %v966, %v971
  %v973 = vadd.f32 %v967, %v971
  %v975 = vrot.slane %v973, 7
  %vm977 = vcmask 1040384
  %v978 = vsel %vm977, %v972, %v975
  %v979 = vpack.c.bf16 %v978, %v978
  %v980 = vlaneseq
  %v981 = vshrl.u32 %v980, 7
  %v982 = vsub.s32 2, %v981
  %v983 = vrot.slane %v25, %v982
  %v988 = vunpack.c.l.b16 %v38
  %v989 = vunpack.c.l.b16 %v39
  %v990 = vunpack.c.l.b16 %v40
  %v991 = vunpack.c.l.b16 %v41
  %v992 = vpack.c.b16 %v989, %v988
  %v993 = vpack.c.b16 %v991, %v990
  %v997 = vsel %vm54, %v979, 0
  %999 = vmatprep.subr.bf16.mxu0 0
  %1000 = vmatpush1.bf16.msra.mxu0 0
  %1001 = vmatprep.subr.bf16.mxu0 0
  %1002 = vmatpush1.bf16.msra.mxu0 0
  %1003 = vmatprep.subr.bf16.mxu0 0
  %1004 = vmatpush1.bf16.msra.mxu0 0
  %1005 = vmatprep.subr.bf16.mxu0 0
  %1006 = vmatpush1.bf16.msra.mxu0 0
  %1007 = vmatprep.subr.bf16.mxu0 0
  %1008 = vmatpush1.bf16.msra.mxu0 0
  %1009 = vmatprep.subr.bf16.mxu0 0
  %1010 = vmatpush1.bf16.msra.mxu0 0
  %1011 = vmatprep.subr.bf16.mxu0 0
  %1012 = vmatpush1.bf16.msra.mxu0 %v993
  %1013 = vmatprep.subr.bf16.mxu0 0
  %1014 = vmatpush1.bf16.msra.mxu0 %v992
  %1015 = vmatprep.subr.bf16.mxu0 0
  %1016 = vmatpush2.bf16.msra.mxu0 0
  %1017 = vmatprep.subr.bf16.mxu0 0
  %1018 = vmatpush2.bf16.msra.mxu0 0
  %1019 = vmatprep.subr.bf16.mxu0 0
  %1020 = vmatpush2.bf16.msra.mxu0 0
  %1021 = vmatprep.subr.bf16.mxu0 0
  %1022 = vmatpush2.bf16.msra.mxu0 0
  %1023 = vmatprep.subr.bf16.mxu0 0
  %1024 = vmatpush2.bf16.msra.mxu0 0
  %1025 = vmatprep.subr.bf16.mxu0 0
  %1026 = vmatpush2.bf16.msra.mxu0 0
  %1027 = vmatprep.subr.bf16.mxu0 0
  %1028 = vmatpush2.bf16.msra.mxu0 0
  %1029 = vmatprep.subr.bf16.mxu0 0
  %1030 = vmatpush2.bf16.msra.mxu0 0
  %1031 = vmatprep.mubr.bf16.mxu0 0
  %1032 = vmatmul.mubr.bf16.gmra.mxu0 %v997
  %v1033 = vpop.f32.mrf.mxu0
  %v1034 = vadd.f32 %v983, %v1033
  %v1035 = vpop.f32.mrf.mxu0
  %v1036 = vpop.f32.mrf.mxu0
  %v1037 = vpop.f32.mrf.mxu0
  %1038 = vdwg.mxu0
  %v1039 = vtanh.pop %v1034
  %v1040 = vpack.c.bf16 %v1039, %v1039
  %v1041 = vlaneseq
  %v1042 = vshrl.u32 %v1041, 7
  %v1043 = vsub.s32 3, %v1042
  %v1044 = vrot.slane %v25, %v1043
  %v1049 = vunpack.c.l.b16 %v42
  %v1050 = vunpack.c.l.b16 %v43
  %v1051 = vunpack.c.l.b16 %v44
  %v1052 = vunpack.c.l.b16 %v45
  %v1053 = vpack.c.b16 %v1050, %v1049
  %v1054 = vpack.c.b16 %v1052, %v1051
  %v1058 = vsel %vm54, %v1040, 0
  %1060 = vmatprep.subr.bf16.mxu0 0
  %1061 = vmatpush1.bf16.msra.mxu0 0
  %1062 = vmatprep.subr.bf16.mxu0 0
  %1063 = vmatpush1.bf16.msra.mxu0 0
  %1064 = vmatprep.subr.bf16.mxu0 0
  %1065 = vmatpush1.bf16.msra.mxu0 0
  %1066 = vmatprep.subr.bf16.mxu0 0
  %1067 = vmatpush1.bf16.msra.mxu0 0
  %1068 = vmatprep.subr.bf16.mxu0 0
  %1069 = vmatpush1.bf16.msra.mxu0 0
  %1070 = vmatprep.subr.bf16.mxu0 0
  %1071 = vmatpush1.bf16.msra.mxu0 0
  %1072 = vmatprep.subr.bf16.mxu0 0
  %1073 = vmatpush1.bf16.msra.mxu0 %v1054
  %1074 = vmatprep.subr.bf16.mxu0 0
  %1075 = vmatpush1.bf16.msra.mxu0 %v1053
  %1076 = vmatprep.subr.bf16.mxu0 0
  %1077 = vmatpush2.bf16.msra.mxu0 0
  %1078 = vmatprep.subr.bf16.mxu0 0
  %1079 = vmatpush2.bf16.msra.mxu0 0
  %1080 = vmatprep.subr.bf16.mxu0 0
  %1081 = vmatpush2.bf16.msra.mxu0 0
  %1082 = vmatprep.subr.bf16.mxu0 0
  %1083 = vmatpush2.bf16.msra.mxu0 0
  %1084 = vmatprep.subr.bf16.mxu0 0
  %1085 = vmatpush2.bf16.msra.mxu0 0
  %1086 = vmatprep.subr.bf16.mxu0 0
  %1087 = vmatpush2.bf16.msra.mxu0 0
  %1088 = vmatprep.subr.bf16.mxu0 0
  %1089 = vmatpush2.bf16.msra.mxu0 0
  %1090 = vmatprep.subr.bf16.mxu0 0
  %1091 = vmatpush2.bf16.msra.mxu0 0
  %1092 = vmatprep.mubr.bf16.mxu0 0
  %1093 = vmatmul.mubr.bf16.gmra.mxu0 %v1058
  %v1094 = vpop.f32.mrf.mxu0
  %v1095 = vadd.f32 %v1044, %v1094
  %v1096 = vpop.f32.mrf.mxu0
  %v1097 = vpop.f32.mrf.mxu0
  %v1098 = vpop.f32.mrf.mxu0
  %1099 = vdwg.mxu0
  %vm1100 = vcmask 1041408
  %v1101 = vsel %vm1100, %v1095, 0.0
  %1102 = vst [vmem:[%s5] sm:$0xff] %v1101
  // Predicated region
  $region22: #{sentiment_forward.1} parent=0 // pred_check
    _
  $region23: #{sentiment_forward.1} parent=0 // pred_check_branch
    %1104 = sbr.rel (0) target = $region25
  $region24: #{sentiment_forward.1} parent=0 // pred_region
    _
  $region25: #{sentiment_forward.1} parent=0 // pred_fallthru
    _
  // Predicated region
  $region26: #{sentiment_forward.1} parent=0 // pred_check
    _
  $region27: #{sentiment_forward.1} parent=0 // pred_check_branch
    %1106 = sbr.rel (0) target = $region29
  $region28: #{sentiment_forward.1} parent=0 // pred_region
    _
  $region29: #{sentiment_forward.1} parent=0 // pred_fallthru
    _

</llo_original>
